<compile_context>
chip_gen: v6e
topology: v6e:2x2x1
jax: 0.10.0
libtpu: 0.0.40
codegen_flags: <defaults>
</compile_context>

<pallas_src>
from collections import OrderedDict
from functools import partial

import jax
import jax.numpy as jnp
from jax.experimental import pallas as pl
from jax.experimental.pallas import tpu as pltpu

_LANE = 128                          # TPU lane width (last dim of every block)
_TARGET_BLOCK_BYTES = 2 * 1024 * 1024  # ~2 MiB per block: ~85% of HBM roofline,
                                       # safe under v5e 16 MiB / v7x 32 MiB scoped VMEM


def _sublane_quantum(dtype) -> int:
    """Minimum legal sublane count for a (rows, 128) block of this dtype."""
    itemsize = jnp.dtype(dtype).itemsize
    return max(8, 32 // itemsize)    # f32 -> 8, bf16 -> 16, int8/fp8 -> 32


def _choose_row_tile(rows: int, dtype) -> int:
    """Dtype-aware row tile: ~2 MiB blocks, multiple of the sublane quantum,
    capped so the grid has at least 2 steps (v7x megacore) when possible."""
    q = _sublane_quantum(dtype)
    itemsize = jnp.dtype(dtype).itemsize
    tile = max(q, (_TARGET_BLOCK_BYTES // (_LANE * itemsize)) // q * q)
    if rows >= 2 * q:                # guarantee >= 2 grid steps for both TCs
        half = max(q, (rows // 2) // q * q)
        tile = min(tile, half)
    return min(tile, rows)


def _fused_sequential_kernel(x_ref, y_ref, *, num_modules: int):
    """All N base-GenModule forwards fused on one lane-dense tile.

    Each sub-module is: viewed = from_flat(p) (identity, params unused);
    y = _forward(viewed, x) = x.  The chain is applied in-register.
    """
    y = x_ref[...]
    for _ in range(num_modules):     # base GenModule._forward is identity
        y = y
    y_ref[...] = y


@partial(jax.jit, static_argnames=("num_modules",))
def _fused_chain(x: jnp.ndarray, num_modules: int) -> jnp.ndarray:
    """Reshape to a lane-dense (rows, 128) slab, run the fused identity chain
    through one aliased pallas_call, and restore the original shape."""
    orig_shape = x.shape
    dtype = x.dtype
    itemsize = jnp.dtype(dtype).itemsize
    total = x.size

    # Pad the flattened activation to a multiple of (sublane_quantum * 128) so
    # the 2-D slab is always a legal lane-dense layout for this dtype.
    q = _sublane_quantum(dtype)
    pad_to = q * _LANE
    padded_total = pl.cdiv(total, pad_to) * pad_to
    flat = x.reshape(total)
    if padded_total != total:
        flat = jnp.pad(flat, (0, padded_total - total))

    rows = padded_total // _LANE
    x2d = flat.reshape(rows, _LANE)

    row_tile = _choose_row_tile(rows, dtype)
    grid = (pl.cdiv(rows, row_tile),)   # Pallas clamps the ragged last block

    y2d = pl.pallas_call(
        partial(_fused_sequential_kernel, num_modules=num_modules),
        out_shape=jax.ShapeDtypeStruct((rows, _LANE), dtype),
        grid_spec=pltpu.PrefetchScalarGridSpec(
            num_scalar_prefetch=0,
            grid=grid,
            in_specs=[pl.BlockSpec((row_tile, _LANE), lambda i: (i, 0))],
            out_specs=pl.BlockSpec((row_tile, _LANE), lambda i: (i, 0)),
        ),
        compiler_params=pltpu.CompilerParams(
            dimension_semantics=("parallel",)),
        cost_estimate=pl.CostEstimate(
            flops=0,
            transcendentals=0,
            bytes_accessed=2 * rows * _LANE * itemsize),
        input_output_aliases={0: 0},     # identity chain: reuse the input buffer
    )(x2d)

    y_flat = y2d.reshape(padded_total)
    if padded_total != total:
        y_flat = y_flat[:total]
    return y_flat.reshape(orig_shape)


def sequential_module_forward(params: "OrderedDict[str, jnp.ndarray]",
                              x: jnp.ndarray,
                              track: bool = True):
    """SequentialModule.forward: threads x through each sub-GenModule (fused)."""
    names = list(params.keys())
    y = _fused_chain(x, num_modules=len(names))

    # Every sub-module's tracked feature equals its (identity) output, which is
    # the same value as the chain output - identical to the PyTorch module,
    # where `feat is y is x` for every stage.  No extra copies are made.
    features = OrderedDict()
    if track:
        for name in names:
            features[name] = y
    return features, y


if __name__ == "__main__":
    key = jax.random.PRNGKey(0)
    kx, k0, k1, k2 = jax.random.split(key, 4)

    # Small shapes consistent with the module: batch=2 models, NCHW activations.
    B, C, H, W = 2, 4, 16, 16
    P = 8                                      # flat param size per sub-module
    x = jax.random.normal(kx, (B, C, H, W), dtype=jnp.float32)

    # Deterministic per-module flat params [B, P].  The base GenModule forward
    # ignores them (identity from_flat), so they are not DMA'd into the kernel.
    params = OrderedDict([
        ("0", jax.random.normal(k0, (B, P), dtype=jnp.float32)),
        ("1", jax.random.normal(k1, (B, P), dtype=jnp.float32)),
        ("2", jax.random.normal(k2, (B, P), dtype=jnp.float32)),
    ])

    features, out = sequential_module_forward(params, x, track=True)
    out = jax.block_until_ready(out)
    for f in features.values():
        jax.block_until_ready(f)

    # Reference check: the base GenModule chain is identity on x, and every
    # tracked feature equals the (identity) output of its sub-module.
    assert out.shape == x.shape and out.dtype == x.dtype
    assert jnp.allclose(out, x)
    assert list(features.keys()) == ["0", "1", "2"]
    for f in features.values():
        assert jnp.allclose(f, x)

    print("KERNEL_OK")
</pallas_src>

<mosaic_0001>
module attributes {stable_mosaic.version = 11 : i64} {
  func.func @_fused_sequential_kernel(%arg0: i32, %arg1: memref<8x128xf32, #tpu.memory_space<vmem>>, %arg2: memref<8x128xf32, #tpu.memory_space<vmem>>) attributes {dimension_semantics = [#tpu.dimension_semantics<parallel>], iteration_bounds = array<i64: 2>, scalar_prefetch = 0 : i64, scratch_operands = 0 : i64, tpu.core_type = #tpu.core_type<tc>, window_params = [{transform_indices = @transform_0, window_bounds = array<i64: 8, 128>}, {transform_indices = @transform_1, window_bounds = array<i64: 8, 128>}]} {
    %c0 = arith.constant 0 : index
    %c0_0 = arith.constant 0 : index
    %0 = vector.load %arg1[%c0, %c0_0] : memref<8x128xf32, #tpu.memory_space<vmem>>, vector<8x128xf32>
    %c0_1 = arith.constant 0 : index
    %c0_2 = arith.constant 0 : index
    %1 = vector.load %arg2[%c0_1, %c0_2] : memref<8x128xf32, #tpu.memory_space<vmem>>, vector<8x128xf32>
    tpu.vector_store %arg2[%c0_1, %c0_2], %0 {strides = array<i32>} : memref<8x128xf32, #tpu.memory_space<vmem>>, vector<8x128xf32>,
    return
  }
  func.func @transform_0(%arg0: i32) -> (i32, i32) {
    %c0_i32 = arith.constant 0 : i32
    %c0_i32_0 = arith.constant 0 : i32
    return %arg0, %c0_i32 : i32, i32
  }
  func.func @transform_1(%arg0: i32) -> (i32, i32) {
    %c0_i32 = arith.constant 0 : i32
    %c0_i32_0 = arith.constant 0 : i32
    return %arg0, %c0_i32 : i32, i32
  }
}

</mosaic_0001>

<llo_original>
// kernel: _fused_chain.1
$region0: #{_fused_chain.1}
  #allocation0 [shape = 'u32[]', space=smem, size = 0x4, offset = 0x4, fixed_abs, tag = 'smem constant byte address 0x4 - core index']
  #allocation1 [shape = 'u32[144,128]{1,0:T(1,128)}', space=vmem, size = 0x12000, scoped, tag = 'internal scratch']
  %s0 = inlined_call_operand.vmem [shape: f32[16,128], index: 0, kind: input, shape index: {}, may-alias: {0,1}]
  %s1 = inlined_call_operand.vmem [shape: f32[16,128], index: 1, kind: output, shape index: {}, may-alias: {0,1}]
  %s2 = sld [smem:[#allocation0]]
  $region37: #{_fused_chain.1} parent=0
    _
  %s4 = ssub.s32 1, %s2
  %s5 = scalar_select 0, %s4, %s2
  loop: start=0, step=1, limit=4
  $region2: #{_fused_chain.1} parent=0 // loop_pre_header
    _
  $region3: #{_fused_chain.1} parent=0 // loop_header
    %s7 = sphi 0, %s11
    %p8 = scmp.ge.s32.totalorder %s7, 4
    %s17 = sphi 0, %s19
    %s20 = sphi 0, %s17
    %s21 = sphi 0, %s20
    %s37 = sphi 0, %s21
    %s43 = sphi 0, %s45
    %s46 = sphi 0, %s43
    %s47 = sphi 0, %s46
    %s63 = sphi 0, %s47
  $region4: #{_fused_chain.1} parent=0 // loop_header_branch
    %10 = sbr.rel (%p8) target = $region8
  $region5: #{_fused_chain.1} parent=0 // loop_body
    %s12 = ssub.s32 %s7, 1
    %s13 = ssub.s32 %s7, 2
    %s14 = sadd.s32 %s7, 1
    %s15 = ssub.s32 %s7, %s14
    %p16 = scmp.eq.s32.totalorder %s15, 0
    %s18 = sadd.s32 %s17, 1
    %s19 = scalar_select %p16, %s17, %s18
    %p22 = pneg %p16
    %p23 = scmp.eq.s32.totalorder %s7, 1
    %p24 = por %p22, %p23
    %p25 = scmp.ne.s32.totalorder %s17, %s20
    %p26 = scmp.eq.s32.totalorder %s7, 0
    %p27 = por %p25, %p26
    %p28 = scmp.ne.s32.totalorder %s17, %s20
    %p29 = scmp.eq.s32.totalorder %s12, 1
    %p30 = por %p28, %p29
    %p31 = scmp.ne.s32.totalorder %s20, %s21
    %p32 = scmp.eq.s32.totalorder %s12, 0
    %p33 = por %p31, %p32
    %p34 = scmp.ne.s32.totalorder %s20, %s21
    %p35 = scmp.eq.s32.totalorder %s13, 1
    %p36 = por %p34, %p35
    %p38 = scmp.ne.s32.totalorder %s21, %s37
    %p39 = scmp.eq.s32.totalorder %s13, 0
    %p40 = por %p38, %p39
    %s41 = ssub.s32 %s7, %s14
    %p42 = scmp.eq.s32.totalorder %s41, 0
    %s44 = sadd.s32 %s43, 1
    %s45 = scalar_select %p42, %s43, %s44
    %p48 = pneg %p42
    %p49 = scmp.eq.s32.totalorder %s7, 1
    %p50 = por %p48, %p49
    %p51 = scmp.ne.s32.totalorder %s43, %s46
    %p52 = scmp.eq.s32.totalorder %s7, 0
    %p53 = por %p51, %p52
    %p54 = scmp.ne.s32.totalorder %s43, %s46
    %p55 = scmp.eq.s32.totalorder %s12, 1
    %p56 = por %p54, %p55
    %p57 = scmp.ne.s32.totalorder %s46, %s47
    %p58 = scmp.eq.s32.totalorder %s12, 0
    %p59 = por %p57, %p58
    %p60 = scmp.ne.s32.totalorder %s46, %s47
    %p61 = scmp.eq.s32.totalorder %s13, 1
    %p62 = por %p60, %p61
    %p64 = scmp.ne.s32.totalorder %s47, %s63
    %p65 = scmp.eq.s32.totalorder %s13, 0
    %p66 = por %p64, %p65
    %p67 = scmp.le.s32.totalorder 1, %s7
    %p68 = scmp.lt.s32.totalorder %s7, 3
    %p69 = pnand %p67, %p68
    %p70 = pneg %p69
    // Predicated region
    $region9: #{_fused_chain.1} parent=5 // pred_check
      _
    $region10: #{_fused_chain.1} parent=5 // pred_check_branch
      %72 = sbr.rel (%p69) target = $region12
    $region11: #{_fused_chain.1} parent=5 // pred_region
      %s73 = ssub.s32 %s7, 1
    $region12: #{_fused_chain.1} parent=5 // pred_fallthru
      _
    %p74 = scmp.lt.s32.totalorder %s7, 2
    // Predicated region
    $region13: #{_fused_chain.1} parent=5 // pred_check
      %p75 = pneg %p74
    $region14: #{_fused_chain.1} parent=5 // pred_check_branch
      %77 = sbr.rel (%p75) target = $region16
    $region15: #{_fused_chain.1} parent=5 // pred_region
      // Predicated region
      $region17: #{_fused_chain.1} parent=15 // pred_check
        %p78 = pneg %p27
      $region18: #{_fused_chain.1} parent=15 // pred_check_branch
        %80 = sbr.rel (%p78) target = $region20
      $region19: #{_fused_chain.1} parent=15 // pred_region
        %p81 = scmp.lt.s32.totalorder %s7, 1
        %s82 = scalar_select %p81, %s7, 1
        %s83 = smul.addr %s82, 8
        %s84 = scalar_lea.vmem %s0, %s83
      $region20: #{_fused_chain.1} parent=15 // pred_fallthru
        _
    $region16: #{_fused_chain.1} parent=5 // pred_fallthru
      _
    %p85 = scmp.le.s32.totalorder 1, %s7
    %p86 = scmp.lt.s32.totalorder %s7, 3
    %p87 = pnand %p85, %p86
    %p88 = pneg %p87
    // Predicated region
    $region21: #{_fused_chain.1} parent=5 // pred_check
      _
    $region22: #{_fused_chain.1} parent=5 // pred_check_branch
      %90 = sbr.rel (%p87) target = $region24
    $region23: #{_fused_chain.1} parent=5 // pred_region
      %s91 = ssub.s32 %s7, 1
      %p92 = scmp.lt.s32.totalorder %s12, 1
      %s93 = scalar_select %p92, %s12, 1
      %s94 = smul.addr %s93, 8
      %s95 = scalar_lea.vmem %s0, %s94
      %p96 = pneg %p33
      %p97 = pneg %p30
      %p98 = pneg %p59
      %p99 = pneg %p56
      %p100 = scmp.lt.s32.totalorder %s12, 1
      %s101 = scalar_select %p100, %s12, 1
      %s102 = smul.addr %s101, 8
      %s103 = scalar_lea.vmem %s1, %s102
      %p104 = scmp.lt.s32.totalorder %s12, 1
      %s105 = scalar_select %p104, %s12, 1
      %s106 = smul.addr %s105, 8
      %s107 = scalar_lea.vmem %s0, %s106
      %p108 = scmp.lt.s32.totalorder %s12, 1
      %s109 = scalar_select %p108, %s12, 1
      %s110 = smul.addr %s109, 8
      %s111 = scalar_lea.vmem %s1, %s110
      %v112 = vld [vmem:[%s107] sm:$0xff]
      %113 = vst [vmem:[%s111] sm:$0xff] %v112
      %p114 = scmp.lt.s32.totalorder %s12, 1
      %s115 = scalar_select %p114, %s12, 1
      %s116 = smul.addr %s115, 8
      %s117 = scalar_lea.vmem %s1, %s116
      // Predicated region
      $region25: #{_fused_chain.1} parent=23 // pred_check
        %p118 = pneg %p56
      $region26: #{_fused_chain.1} parent=23 // pred_check_branch
        %120 = sbr.rel (%p118) target = $region28
      $region27: #{_fused_chain.1} parent=23 // pred_region
        _
      $region28: #{_fused_chain.1} parent=23 // pred_fallthru
        _
    $region24: #{_fused_chain.1} parent=5 // pred_fallthru
      _
    %p121 = scmp.le.s32.totalorder 2, %s7
    // Predicated region
    $region29: #{_fused_chain.1} parent=5 // pred_check
      %p122 = pneg %p121
    $region30: #{_fused_chain.1} parent=5 // pred_check_branch
      %124 = sbr.rel (%p122) target = $region32
    $region31: #{_fused_chain.1} parent=5 // pred_region
      %s125 = ssub.s32 %s7, 2
      // Predicated region
      $region33: #{_fused_chain.1} parent=31 // pred_check
        %p126 = pneg %p62
      $region34: #{_fused_chain.1} parent=31 // pred_check_branch
        %128 = sbr.rel (%p126) target = $region36
      $region35: #{_fused_chain.1} parent=31 // pred_region
        %p129 = scmp.lt.s32.totalorder %s13, 1
        %s130 = scalar_select %p129, %s13, 1
        %s131 = smul.addr %s130, 8
        %s132 = scalar_lea.vmem %s1, %s131
      $region36: #{_fused_chain.1} parent=31 // pred_fallthru
        _
    $region32: #{_fused_chain.1} parent=5 // pred_fallthru
      _
  $region6: #{_fused_chain.1} parent=0 // loop_footer
    %s11 = sadd.s32 1, %s7
  $region7: #{_fused_chain.1} parent=0 // loop_footer_branch
    %6 = sbr.rel target = $region3
  $region8: #{_fused_chain.1} parent=0 // loop_exit
    _

</llo_original>
